<compile_context>
chip_gen: v7x
topology: tpu7x:2x2x1
jax: 0.10.0
libtpu: 0.0.40
codegen_flags: <defaults>
</compile_context>

<pallas_src>
import functools

import jax
import jax.numpy as jnp
from jax.experimental import pallas as pl
from jax.experimental.pallas import tpu as pltpu


# ---------------- Pallas kernel ----------------
def dueling_head_kernel(x_ref, w1_ref, b1_ref, wf_ref, bf_ref, out_ref):
    x = x_ref[...]                                                     # [tb, D_pad]

    # fused first layer (adv|val halves concatenated): Linear -> ReLU
    h = jnp.dot(x, w1_ref[...], preferred_element_type=jnp.float32) + b1_ref[...]
    h = jnp.maximum(h, 0.0)                                            # [tb, 2H] f32 (VPU)
    h = h.astype(wf_ref.dtype)

    # single folded second layer: adv/value heads + action-mean + dueling combine
    y = jnp.dot(h, wf_ref[...], preferred_element_type=jnp.float32) + bf_ref[...]
    out_ref[...] = y.astype(out_ref.dtype)                             # [tb, AN_pad]


# ---------------- helpers ----------------
def _round_up(x, m):
    return ((x + m - 1) // m) * m


def _pick_batch_tile(B):
    """Pad B to a sublane multiple, split into <=256-row tiles, >=2 tiles if B>=16."""
    b_min = _round_up(B, 8)
    n_tiles = max(pl.cdiv(b_min, 256), 2 if b_min >= 16 else 1)
    tb = _round_up(pl.cdiv(b_min, n_tiles), 8)
    grid_n = pl.cdiv(b_min, tb)
    return tb * grid_n, tb, grid_n          # (B_pad, tile_b, num_grid_steps)


# ---------------- one-time weight preparation (hoisted out of the call path) ----------------
def prepare_params(params, *, output_size, n_atoms, compute_dtype):
    A, N = output_size, n_atoms
    AN = A * N
    AN_pad = _round_up(AN, 128)            # lane-dense output (306 -> 384)

    w1a, b1a = params["w1a"], params["b1a"]      # [H, D], [H]
    w2a, b2a = params["w2a"], params["b2a"]      # [AN, H], [AN]
    w1v, b1v = params["w1v"], params["b1v"]      # [H, D], [H]
    w2v, b2v = params["w2v"], params["b2v"]      # [N, H], [N]
    # params["adv_bias"] cancels exactly in adv - mean_a(adv); not needed in the fold.
    H, D = w1a.shape
    D_pad = _round_up(D, 128)              # lane-dense contraction dim for the big matmul
    H_pad = _round_up(H, 64)               # so the concatenated 2H axis is a 128 multiple
    H2 = 2 * H_pad

    # fused + padded first layer: [D_pad, 2H_pad]
    w1_cat = jnp.zeros((D_pad, H2), jnp.float32)
    w1_cat = w1_cat.at[:D, :H].set(w1a.T)
    w1_cat = w1_cat.at[:D, H_pad:H_pad + H].set(w1v.T)
    b1_cat = jnp.zeros((1, H2), jnp.float32)
    b1_cat = b1_cat.at[0, :H].set(b1a).at[0, H_pad:H_pad + H].set(b1v)

    # folded second layer: adv head centered over actions + value head broadcast
    w2aT = w2a.T.reshape(H, A, N)                                   # [H, A, N]
    w2aT_centered = (w2aT - w2aT.mean(axis=1, keepdims=True)).reshape(H, AN)
    w2vT_bcast = jnp.tile(w2v.T, (1, A))                            # [H, AN], col a*N+n -> w2v^T[:, n]

    w_final = jnp.zeros((H2, AN_pad), jnp.float32)
    w_final = w_final.at[:H, :AN].set(w2aT_centered)
    w_final = w_final.at[H_pad:H_pad + H, :AN].set(w2vT_bcast)

    b2a_c = (b2a.reshape(A, N) - b2a.reshape(A, N).mean(axis=0, keepdims=True)).reshape(AN)
    b_final = jnp.zeros((1, AN_pad), jnp.float32)
    b_final = b_final.at[0, :AN].set(b2a_c + jnp.tile(b2v, A))

    return dict(
        w1=w1_cat.astype(compute_dtype),
        b1=b1_cat.astype(jnp.float32),
        wf=w_final.astype(compute_dtype),
        bf=b_final.astype(jnp.float32),
        D=D, D_pad=D_pad, H2=H2, AN=AN, AN_pad=AN_pad,
    )


def make_forward(params, *, output_size, n_atoms,
                 compute_dtype=jnp.bfloat16, out_dtype=jnp.float32):
    """Prepares fused/padded weights once and returns a jitted forward(x_nchw)."""
    prep = prepare_params(params, output_size=output_size, n_atoms=n_atoms,
                          compute_dtype=compute_dtype)
    A, N = output_size, n_atoms
    D, D_pad, H2 = prep["D"], prep["D_pad"], prep["H2"]
    AN, AN_pad = prep["AN"], prep["AN_pad"]
    w1, b1, wf, bf = prep["w1"], prep["b1"], prep["wf"], prep["bf"]

    w_bytes = jnp.dtype(compute_dtype).itemsize
    o_bytes = jnp.dtype(out_dtype).itemsize
    weight_bytes = (D_pad * H2 + H2 * AN_pad) * w_bytes + (H2 + AN_pad) * 4

    # TODO(synk): for tiny-batch serving (B~2) the call is weight-DMA/launch bound;
    # amortize by batching requests or keeping W1/W_final resident across calls
    # (cross-pallas_call VMEM/semaphore outputs, P10 pattern) — not done here.

    @jax.jit
    def forward(x_nchw):
        B = x_nchw.shape[0]
        x = x_nchw.reshape(B, -1).astype(compute_dtype)                # [B, D]
        B_pad, tb, grid_n = _pick_batch_tile(B)                        # static ints
        x = jnp.pad(x, ((0, B_pad - B), (0, D_pad - D)))               # [B_pad, D_pad]

        per_tile_bytes = tb * D_pad * w_bytes + tb * AN_pad * o_bytes
        interm_bytes = tb * (H2 + AN_pad) * 4                          # f32 intermediates
        vmem_limit = int(min(max(2 * (weight_bytes + per_tile_bytes)
                                 + 2 * interm_bytes + (2 << 20), 16 << 20), 64 << 20))

        cost = pl.CostEstimate(
            flops=2 * B_pad * (D_pad * H2 + H2 * AN_pad),
            transcendentals=0,
            bytes_accessed=B_pad * D_pad * w_bytes + weight_bytes
                           + B_pad * AN_pad * o_bytes)

        const2d = lambda shape: pl.BlockSpec(shape, lambda i: (0, 0))  # grid-invariant: DMA'd once

        out = pl.pallas_call(
            dueling_head_kernel,
            out_shape=jax.ShapeDtypeStruct((B_pad, AN_pad), out_dtype),
            grid=(grid_n,),
            in_specs=[
                pl.BlockSpec((tb, D_pad), lambda i: (i, 0)),           # x
                const2d((D_pad, H2)), const2d((1, H2)),                # W1, b1
                const2d((H2, AN_pad)), const2d((1, AN_pad)),           # W_final, b_final
            ],
            out_specs=pl.BlockSpec((tb, AN_pad), lambda i: (i, 0)),
            compiler_params=pltpu.CompilerParams(
                dimension_semantics=("parallel",),
                vmem_limit_bytes=vmem_limit),
            cost_estimate=cost,
        )(x, w1, b1, wf, bf)

        return out[:B, :AN].reshape(B, A, N)

    return forward


# ---------------- deterministic parameter init (mimics nn.Linear default) ----------------
def init_params(key, in_features, hidden, output_size, n_atoms):
    ks = jax.random.split(key, 8)

    def linear_init(kw, kb, fan_in, fan_out):
        bound = 1.0 / jnp.sqrt(jnp.float32(fan_in))
        w = jax.random.uniform(kw, (fan_out, fan_in), jnp.float32, -bound, bound)
        b = jax.random.uniform(kb, (fan_out,), jnp.float32, -bound, bound)
        return w, b

    w1a, b1a = linear_init(ks[0], ks[1], in_features, hidden)
    w2a, b2a = linear_init(ks[2], ks[3], hidden, output_size * n_atoms)
    w1v, b1v = linear_init(ks[4], ks[5], in_features, hidden)
    w2v, b2v = linear_init(ks[6], ks[7], hidden, n_atoms)
    adv_bias = jnp.zeros((n_atoms,), jnp.float32)
    return dict(w1a=w1a, b1a=b1a, w2a=w2a, b2a=b2a,
                w1v=w1v, b1v=b1v, w2v=w2v, b2v=b2v, adv_bias=adv_bias)


# ---------------- pure-JAX reference for verification ----------------
def ref_forward(x_nchw, params, *, output_size, n_atoms):
    B = x_nchw.shape[0]
    xf = x_nchw.reshape(B, -1).astype(jnp.float32)
    ha = jnp.maximum(xf @ params["w1a"].T + params["b1a"], 0.0)
    adv = (ha @ params["w2a"].T + params["b2a"]).reshape(B, output_size, n_atoms) \
          + params["adv_bias"]
    hv = jnp.maximum(xf @ params["w1v"].T + params["b1v"], 0.0)
    val = (hv @ params["w2v"].T + params["b2v"]).reshape(B, 1, n_atoms)
    return val + (adv - adv.mean(axis=1, keepdims=True))


if __name__ == "__main__":
    # small shapes consistent with the module: pixels = H*W, in_features = pixels*C
    # TODO(synk): scale_grad only affects the backward pass (identity in forward); the
    # NoisyLinear (noisy=1) noise-sampling path is not translated — this is the noisy=0 forward.
    B, C, Hs, Ws = 2, 4, 4, 4          # pixels = 16, in_features = 64
    hidden = 32
    output_size = 6
    n_atoms = 51
    in_features = C * Hs * Ws

    key = jax.random.PRNGKey(0)
    kx, kp = jax.random.split(key)
    x = jax.random.normal(kx, (B, C, Hs, Ws), jnp.float32)   # layout: NCHW
    params = init_params(kp, in_features, hidden, output_size, n_atoms)

    ref = ref_forward(x, params, output_size=output_size, n_atoms=n_atoms)

    # f32 path: tight tolerance
    fwd_f32 = make_forward(params, output_size=output_size, n_atoms=n_atoms,
                           compute_dtype=jnp.float32, out_dtype=jnp.float32)
    out_f32 = jax.block_until_ready(fwd_f32(x))
    assert out_f32.shape == (B, output_size, n_atoms), out_f32.shape
    assert jnp.allclose(out_f32, ref, atol=1e-3, rtol=1e-3), "f32 mismatch vs reference"

    # bf16 matmul-operand + bf16-output path (native MXU dtype): looser tolerance
    fwd_bf16 = make_forward(params, output_size=output_size, n_atoms=n_atoms,
                            compute_dtype=jnp.bfloat16, out_dtype=jnp.bfloat16)
    out_bf16 = jax.block_until_ready(fwd_bf16(x))
    assert out_bf16.shape == (B, output_size, n_atoms), out_bf16.shape
    assert jnp.allclose(out_bf16.astype(jnp.float32), ref, atol=5e-2, rtol=5e-2), \
        "bf16 mismatch vs reference"

    print("KERNEL_OK")
</pallas_src>

<mosaic_0001>
module attributes {stable_mosaic.version = 11 : i64} {
  func.func @dueling_head_kernel(%arg0: i32, %arg1: memref<8x128xf32, #tpu.memory_space<vmem>>, %arg2: memref<128x128xf32, #tpu.memory_space<vmem>>, %arg3: memref<1x128xf32, #tpu.memory_space<vmem>>, %arg4: memref<128x384xf32, #tpu.memory_space<vmem>>, %arg5: memref<1x384xf32, #tpu.memory_space<vmem>>, %arg6: memref<8x384xf32, #tpu.memory_space<vmem>>) attributes {dimension_semantics = [#tpu.dimension_semantics<parallel>], iteration_bounds = array<i64: 1>, scalar_prefetch = 0 : i64, scratch_operands = 0 : i64, tpu.core_type = #tpu.core_type<tc>, window_params = [{transform_indices = @transform_0, window_bounds = array<i64: 8, 128>}, {pipeline_mode = #tpu.pipeline_mode<synchronous>, transform_indices = @transform_1, window_bounds = array<i64: 128, 128>}, {pipeline_mode = #tpu.pipeline_mode<synchronous>, transform_indices = @transform_2, window_bounds = array<i64: 1, 128>}, {pipeline_mode = #tpu.pipeline_mode<synchronous>, transform_indices = @transform_3, window_bounds = array<i64: 128, 384>}, {pipeline_mode = #tpu.pipeline_mode<synchronous>, transform_indices = @transform_4, window_bounds = array<i64: 1, 384>}, {transform_indices = @transform_5, window_bounds = array<i64: 8, 384>}]} {
    %c0 = arith.constant 0 : index
    %c0_0 = arith.constant 0 : index
    %0 = vector.load %arg1[%c0, %c0_0] : memref<8x128xf32, #tpu.memory_space<vmem>>, vector<8x128xf32>
    %c0_1 = arith.constant 0 : index
    %c0_2 = arith.constant 0 : index
    %1 = vector.load %arg2[%c0_1, %c0_2] : memref<128x128xf32, #tpu.memory_space<vmem>>, vector<128x128xf32>
    %cst = arith.constant dense<0.000000e+00> : vector<8x128xf32>
    %2 = tpu.matmul %0, %1, %cst {dimension_numbers = #tpu.dot_dimension_numbers<[1], [0], [0], [1], [0, 0, 1, 1], [], []>} : vector<8x128xf32>, vector<128x128xf32>, vector<8x128xf32> -> vector<8x128xf32>
    %c0_3 = arith.constant 0 : index
    %c0_4 = arith.constant 0 : index
    %3 = vector.load %arg3[%c0_3, %c0_4] : memref<1x128xf32, #tpu.memory_space<vmem>>, vector<1x128xf32>
    %4 = vector.broadcast %3 : vector<1x128xf32> to vector<8x128xf32>
    %5 = arith.addf %2, %4 : vector<8x128xf32>
    %cst_5 = arith.constant 0.000000e+00 : f32
    %6 = vector.broadcast %cst_5 : f32 to vector<8x128xf32>
    %7 = arith.maximumf %5, %6 : vector<8x128xf32>
    %c0_6 = arith.constant 0 : index
    %c0_7 = arith.constant 0 : index
    %8 = vector.load %arg4[%c0_6, %c0_7] : memref<128x384xf32, #tpu.memory_space<vmem>>, vector<128x384xf32>
    %cst_8 = arith.constant dense<0.000000e+00> : vector<8x384xf32>
    %9 = tpu.matmul %7, %8, %cst_8 {dimension_numbers = #tpu.dot_dimension_numbers<[1], [0], [0], [1], [0, 0, 1, 1], [], []>} : vector<8x128xf32>, vector<128x384xf32>, vector<8x384xf32> -> vector<8x384xf32>
    %c0_9 = arith.constant 0 : index
    %c0_10 = arith.constant 0 : index
    %10 = vector.load %arg5[%c0_9, %c0_10] : memref<1x384xf32, #tpu.memory_space<vmem>>, vector<1x384xf32>
    %11 = vector.broadcast %10 : vector<1x384xf32> to vector<8x384xf32>
    %12 = arith.addf %9, %11 : vector<8x384xf32>
    %c0_11 = arith.constant 0 : index
    %c0_12 = arith.constant 0 : index
    %13 = vector.load %arg6[%c0_11, %c0_12] : memref<8x384xf32, #tpu.memory_space<vmem>>, vector<8x384xf32>
    tpu.vector_store %arg6[%c0_11, %c0_12], %12 {strides = array<i32>} : memref<8x384xf32, #tpu.memory_space<vmem>>, vector<8x384xf32>,
    return
  }
  func.func @transform_0(%arg0: i32) -> (i32, i32) {
    %c0_i32 = arith.constant 0 : i32
    %c0_i32_0 = arith.constant 0 : i32
    return %arg0, %c0_i32 : i32, i32
  }
  func.func @transform_1(%arg0: i32) -> (i32, i32) {
    %c0_i32 = arith.constant 0 : i32
    %c0_i32_0 = arith.constant 0 : i32
    %c0_i32_1 = arith.constant 0 : i32
    return %c0_i32, %c0_i32_0 : i32, i32
  }
  func.func @transform_2(%arg0: i32) -> (i32, i32) {
    %c0_i32 = arith.constant 0 : i32
    %c0_i32_0 = arith.constant 0 : i32
    %c0_i32_1 = arith.constant 0 : i32
    return %c0_i32, %c0_i32_0 : i32, i32
  }
  func.func @transform_3(%arg0: i32) -> (i32, i32) {
    %c0_i32 = arith.constant 0 : i32
    %c0_i32_0 = arith.constant 0 : i32
    %c0_i32_1 = arith.constant 0 : i32
    return %c0_i32, %c0_i32_0 : i32, i32
  }
  func.func @transform_4(%arg0: i32) -> (i32, i32) {
    %c0_i32 = arith.constant 0 : i32
    %c0_i32_0 = arith.constant 0 : i32
    %c0_i32_1 = arith.constant 0 : i32
    return %c0_i32, %c0_i32_0 : i32, i32
  }
  func.func @transform_5(%arg0: i32) -> (i32, i32) {
    %c0_i32 = arith.constant 0 : i32
    %c0_i32_0 = arith.constant 0 : i32
    return %arg0, %c0_i32 : i32, i32
  }
}

</mosaic_0001>

<llo_original>
// kernel: forward.1
$region0: #{forward.1}
  #allocation0 [shape = 'u32[]', space=smem, size = 0x4, offset = 0x4, fixed_abs, tag = 'smem constant byte address 0x4 - core index']
  #allocation1 [shape = 'u32[144,128]{1,0:T(1,128)}', space=vmem, size = 0x12000, scoped, tag = 'internal scratch']
  %s0 = inlined_call_operand.vmem [shape: f32[8,128], index: 0, kind: input, shape index: {}]
  %s1 = inlined_call_operand.hbm [shape: f32[128,128], index: 1, kind: input, shape index: {}]
  %s2 = inlined_call_operand.vmem [shape: f32[1,128], index: 2, kind: input, shape index: {}]
  %s3 = inlined_call_operand.hbm [shape: f32[128,384], index: 3, kind: input, shape index: {}]
  %s4 = inlined_call_operand.vmem [shape: f32[1,384], index: 4, kind: input, shape index: {}]
  %s5 = inlined_call_operand.vmem [shape: f32[8,384], index: 5, kind: output, shape index: {}]
  %s6 = sld [smem:[#allocation0]]
  $region38: #{forward.1} parent=0
    _
  %s8 = ssub.s32 1, %s6
  %s9 = scalar_select 0, %s8, %s6
  $region1: #{forward.1} parent=0
    #allocation2 [shape = 'u8[65536]{0}', space=vmem, size = 0x10000, scoped, tag = 'input window, operand 1, single buffered']
    #allocation3 [shape = 's32[1]{0}', space=sflag, size = 0x4, scoped, tag = 'scoped memory for forward.1']
    #allocation4 [shape = 'u8[196608]{0}', space=vmem, size = 0x30000, scoped, tag = 'input window, operand 3, single buffered']
    #allocation5 [shape = 's32[1]{0}', space=sflag, size = 0x4, scoped, tag = 'scoped memory for forward.1']
    %10 = vsyncpa [#allocation3], 0
    %11 = vsyncpa [#allocation5], 0
    // Predicated region
    $region2: #{forward.1} parent=1 // pred_check
      _
    $region3: #{forward.1} parent=1 // pred_check_branch
      %13 = sbr.rel (0) target = $region5
    $region4: #{forward.1} parent=1 // pred_region
      _
    $region5: #{forward.1} parent=1 // pred_fallthru
      _
    // Predicated region
    $region6: #{forward.1} parent=1 // pred_check
      _
    $region7: #{forward.1} parent=1 // pred_check_branch
      %15 = sbr.rel (0) target = $region9
    $region8: #{forward.1} parent=1 // pred_region
      %s17 = ssub.s32 2048, 2048
      %18 = vsyncadd [#allocation3], %s17
      %s19 = sshll.u32 [#allocation2], 4
      %s20 = int_to_ptr.vmem [resolvable:$true] %s19
      %25 = dma.hbm_to_vmem [thread:$0]  %s1, 2048, %s20, [#allocation3], 128, 128, 8
    $region9: #{forward.1} parent=1 // pred_fallthru
      _
    // Predicated region
    $region10: #{forward.1} parent=1 // pred_check
      _
    $region11: #{forward.1} parent=1 // pred_check_branch
      %27 = sbr.rel (0) target = $region13
    $region12: #{forward.1} parent=1 // pred_region
      _
    $region13: #{forward.1} parent=1 // pred_fallthru
      _
    // Predicated region
    $region14: #{forward.1} parent=1 // pred_check
      _
    $region15: #{forward.1} parent=1 // pred_check_branch
      %29 = sbr.rel (0) target = $region17
    $region16: #{forward.1} parent=1 // pred_region
      %s31 = ssub.s32 6144, 6144
      %32 = vsyncadd [#allocation5], %s31
      %s33 = sshll.u32 [#allocation4], 4
      %s34 = int_to_ptr.vmem [resolvable:$true] %s33
      %39 = dma.hbm_to_vmem [thread:$0]  %s3, 6144, %s34, [#allocation5], 384, 384, 24
    $region17: #{forward.1} parent=1 // pred_fallthru
      _
    // Predicated region
    $region18: #{forward.1} parent=1 // pred_check
      _
    $region19: #{forward.1} parent=1 // pred_check_branch
      %41 = sbr.rel (0) target = $region21
    $region20: #{forward.1} parent=1 // pred_region
      _
    $region21: #{forward.1} parent=1 // pred_fallthru
      _
    // Predicated region
    $region22: #{forward.1} parent=1 // pred_check
      _
    $region23: #{forward.1} parent=1 // pred_check_branch
      %43 = sbr.rel (0) target = $region25
    $region24: #{forward.1} parent=1 // pred_region
      %44 = dma.done [#allocation3], 2048
    $region25: #{forward.1} parent=1 // pred_fallthru
      _
    // Predicated region
    $region26: #{forward.1} parent=1 // pred_check
      _
    $region27: #{forward.1} parent=1 // pred_check_branch
      %46 = sbr.rel (0) target = $region29
    $region28: #{forward.1} parent=1 // pred_region
      %47 = dma.done [#allocation5], 6144
    $region29: #{forward.1} parent=1 // pred_fallthru
      _
    %v48 = vld [vmem:[%s0] sm:$0xff]
    %v49 = vld [vmem:[#allocation2] sm:$0xff]
    %v50 = vld [vmem:[#allocation2 + $0x8] sm:$0xff]
    %v51 = vld [vmem:[#allocation2 + $0x10] sm:$0xff]
    %v52 = vld [vmem:[#allocation2 + $0x18] sm:$0xff]
    %v53 = vld [vmem:[#allocation2 + $0x20] sm:$0xff]
    %v54 = vld [vmem:[#allocation2 + $0x28] sm:$0xff]
    %v55 = vld [vmem:[#allocation2 + $0x30] sm:$0xff]
    %v56 = vld [vmem:[#allocation2 + $0x38] sm:$0xff]
    %v57 = vld [vmem:[#allocation2 + $0x40] sm:$0xff]
    %v58 = vld [vmem:[#allocation2 + $0x48] sm:$0xff]
    %v59 = vld [vmem:[#allocation2 + $0x50] sm:$0xff]
    %v60 = vld [vmem:[#allocation2 + $0x58] sm:$0xff]
    %v61 = vld [vmem:[#allocation2 + $0x60] sm:$0xff]
    %v62 = vld [vmem:[#allocation2 + $0x68] sm:$0xff]
    %v63 = vld [vmem:[#allocation2 + $0x70] sm:$0xff]
    %v64 = vld [vmem:[#allocation2 + $0x78] sm:$0xff]
    %v65 = vld [vmem:[%s2] sm:$0x1]
    %v67 = vlaneseq
    %v68 = vshrl.u32 %v67, 7
    %v69 = vsub.s32 0, %v68
    %v70 = vrot.slane %v65, %v69
    %72 = vmatprep.subr.mxu0 0.0
    %73 = vmatpush1.msra.mxu0 %v49
    %74 = vmatprep.subr.mxu0 0.0
    %75 = vmatpush1.msra.mxu0 %v50
    %76 = vmatprep.subr.mxu0 0.0
    %77 = vmatpush1.msra.mxu0 %v51
    %78 = vmatprep.subr.mxu0 0.0
    %79 = vmatpush1.msra.mxu0 %v52
    %80 = vmatprep.subr.mxu0 0.0
    %81 = vmatpush1.msra.mxu0 %v53
    %82 = vmatprep.subr.mxu0 0.0
    %83 = vmatpush1.msra.mxu0 %v54
    %84 = vmatprep.subr.mxu0 0.0
    %85 = vmatpush1.msra.mxu0 %v55
    %86 = vmatprep.subr.mxu0 0.0
    %87 = vmatpush1.msra.mxu0 %v56
    %88 = vmatprep.subr.mxu0 0.0
    %89 = vmatpush1.msra.mxu0 %v57
    %90 = vmatprep.subr.mxu0 0.0
    %91 = vmatpush1.msra.mxu0 %v58
    %92 = vmatprep.subr.mxu0 0.0
    %93 = vmatpush1.msra.mxu0 %v59
    %94 = vmatprep.subr.mxu0 0.0
    %95 = vmatpush1.msra.mxu0 %v60
    %96 = vmatprep.subr.mxu0 0.0
    %97 = vmatpush1.msra.mxu0 %v61
    %98 = vmatprep.subr.mxu0 0.0
    %99 = vmatpush1.msra.mxu0 %v62
    %100 = vmatprep.subr.mxu0 0.0
    %101 = vmatpush1.msra.mxu0 %v63
    %102 = vmatprep.subr.mxu0 0.0
    %103 = vmatpush1.msra.mxu0 %v64
    %104 = vmatprep.subr.mxu0 0.0
    %105 = vmatpush1.msra.mxu0 0.0
    %106 = vmatprep.subr.mxu0 0.0
    %107 = vmatpush1.msra.mxu0 0.0
    %108 = vmatprep.subr.mxu0 0.0
    %109 = vmatpush1.msra.mxu0 0.0
    %110 = vmatprep.subr.mxu0 0.0
    %111 = vmatpush1.msra.mxu0 0.0
    %112 = vmatprep.subr.mxu0 0.0
    %113 = vmatpush1.msra.mxu0 0.0
    %114 = vmatprep.subr.mxu0 0.0
    %115 = vmatpush1.msra.mxu0 0.0
    %116 = vmatprep.subr.mxu0 0.0
    %117 = vmatpush1.msra.mxu0 0.0
    %118 = vmatprep.subr.mxu0 0.0
    %119 = vmatpush1.msra.mxu0 0.0
    %120 = vmatprep.subr.mxu0 0.0
    %121 = vmatpush1.msra.mxu0 0.0
    %122 = vmatprep.subr.mxu0 0.0
    %123 = vmatpush1.msra.mxu0 0.0
    %124 = vmatprep.subr.mxu0 0.0
    %125 = vmatpush1.msra.mxu0 0.0
    %126 = vmatprep.subr.mxu0 0.0
    %127 = vmatpush1.msra.mxu0 0.0
    %128 = vmatprep.subr.mxu0 0.0
    %129 = vmatpush1.msra.mxu0 0.0
    %130 = vmatprep.subr.mxu0 0.0
    %131 = vmatpush1.msra.mxu0 0.0
    %132 = vmatprep.subr.mxu0 0.0
    %133 = vmatpush1.msra.mxu0 0.0
    %134 = vmatprep.subr.mxu0 0.0
    %135 = vmatpush1.msra.mxu0 0.0
    %136 = vmatprep.mubr.f32.mxu0 0.0
    %137 = vmatmul.mubr.f32.gmra.mrb[0].mxu0 %v48
    %v138 = vpop.f32.mrb[0].mxu0
    %v139 = vadd.f32 %v70, %v138
    %v140 = vpop.f32.mrb[0].mxu0
    %141 = vdwg.mxu0
    %v142 = vmax.f32 %v139, 0.0
    %v143 = vld [vmem:[#allocation4] sm:$0xff]
    %v144 = vld [vmem:[#allocation4 + $0x8] sm:$0xff]
    %v145 = vld [vmem:[#allocation4 + $0x10] sm:$0xff]
    %v146 = vld [vmem:[#allocation4 + $0x18] sm:$0xff]
    %v147 = vld [vmem:[#allocation4 + $0x20] sm:$0xff]
    %v148 = vld [vmem:[#allocation4 + $0x28] sm:$0xff]
    %v149 = vld [vmem:[#allocation4 + $0x30] sm:$0xff]
    %v150 = vld [vmem:[#allocation4 + $0x38] sm:$0xff]
    %v151 = vld [vmem:[#allocation4 + $0x40] sm:$0xff]
    %v152 = vld [vmem:[#allocation4 + $0x48] sm:$0xff]
    %v153 = vld [vmem:[#allocation4 + $0x50] sm:$0xff]
    %v154 = vld [vmem:[#allocation4 + $0x58] sm:$0xff]
    %v155 = vld [vmem:[#allocation4 + $0x60] sm:$0xff]
    %v156 = vld [vmem:[#allocation4 + $0x68] sm:$0xff]
    %v157 = vld [vmem:[#allocation4 + $0x70] sm:$0xff]
    %v158 = vld [vmem:[#allocation4 + $0x78] sm:$0xff]
    %v159 = vld [vmem:[#allocation4 + $0x80] sm:$0xff]
    %v160 = vld [vmem:[#allocation4 + $0x88] sm:$0xff]
    %v161 = vld [vmem:[#allocation4 + $0x90] sm:$0xff]
    %v162 = vld [vmem:[#allocation4 + $0x98] sm:$0xff]
    %v163 = vld [vmem:[#allocation4 + $0xa0] sm:$0xff]
    %v164 = vld [vmem:[#allocation4 + $0xa8] sm:$0xff]
    %v165 = vld [vmem:[#allocation4 + $0xb0] sm:$0xff]
    %v166 = vld [vmem:[#allocation4 + $0xb8] sm:$0xff]
    %v167 = vld [vmem:[#allocation4 + $0xc0] sm:$0xff]
    %v168 = vld [vmem:[#allocation4 + $0xc8] sm:$0xff]
    %v169 = vld [vmem:[#allocation4 + $0xd0] sm:$0xff]
    %v170 = vld [vmem:[#allocation4 + $0xd8] sm:$0xff]
    %v171 = vld [vmem:[#allocation4 + $0xe0] sm:$0xff]
    %v172 = vld [vmem:[#allocation4 + $0xe8] sm:$0xff]
    %v173 = vld [vmem:[#allocation4 + $0xf0] sm:$0xff]
    %v174 = vld [vmem:[#allocation4 + $0xf8] sm:$0xff]
    %v175 = vld [vmem:[#allocation4 + $0x100] sm:$0xff]
    %v176 = vld [vmem:[#allocation4 + $0x108] sm:$0xff]
    %v177 = vld [vmem:[#allocation4 + $0x110] sm:$0xff]
    %v178 = vld [vmem:[#allocation4 + $0x118] sm:$0xff]
    %v179 = vld [vmem:[#allocation4 + $0x120] sm:$0xff]
    %v180 = vld [vmem:[#allocation4 + $0x128] sm:$0xff]
    %v181 = vld [vmem:[#allocation4 + $0x130] sm:$0xff]
    %v182 = vld [vmem:[#allocation4 + $0x138] sm:$0xff]
    %v183 = vld [vmem:[#allocation4 + $0x140] sm:$0xff]
    %v184 = vld [vmem:[#allocation4 + $0x148] sm:$0xff]
    %v185 = vld [vmem:[#allocation4 + $0x150] sm:$0xff]
    %v186 = vld [vmem:[#allocation4 + $0x158] sm:$0xff]
    %v187 = vld [vmem:[#allocation4 + $0x160] sm:$0xff]
    %v188 = vld [vmem:[#allocation4 + $0x168] sm:$0xff]
    %v189 = vld [vmem:[#allocation4 + $0x170] sm:$0xff]
    %v190 = vld [vmem:[#allocation4 + $0x178] sm:$0xff]
    %v191 = vld [vmem:[%s4] sm:$0x7]
    %v193 = vlaneseq
    %v194 = vshrl.u32 %v193, 7
    %v195 = vsub.s32 0, %v194
    %v196 = vrot.slane %v191, %v195
    %v197 = vlaneseq
    %v198 = vshrl.u32 %v197, 7
    %v199 = vsub.s32 1, %v198
    %v200 = vrot.slane %v191, %v199
    %v201 = vlaneseq
    %v202 = vshrl.u32 %v201, 7
    %v203 = vsub.s32 2, %v202
    %v204 = vrot.slane %v191, %v203
    %208 = vmatprep.subr.mxu0 %v144
    %209 = vmatpush1.msra.mxu0 %v143
    %210 = vmatprep.subr.mxu0 %v147
    %211 = vmatpush1.msra.mxu0 %v146
    %212 = vmatprep.subr.mxu0 %v150
    %213 = vmatpush1.msra.mxu0 %v149
    %214 = vmatprep.subr.mxu0 %v153
    %215 = vmatpush1.msra.mxu0 %v152
    %216 = vmatprep.subr.mxu0 %v156
    %217 = vmatpush1.msra.mxu0 %v155
    %218 = vmatprep.subr.mxu0 %v159
    %219 = vmatpush1.msra.mxu0 %v158
    %220 = vmatprep.subr.mxu0 %v162
    %221 = vmatpush1.msra.mxu0 %v161
    %222 = vmatprep.subr.mxu0 %v165
    %223 = vmatpush1.msra.mxu0 %v164
    %224 = vmatprep.subr.mxu0 %v168
    %225 = vmatpush1.msra.mxu0 %v167
    %226 = vmatprep.subr.mxu0 %v171
    %227 = vmatpush1.msra.mxu0 %v170
    %228 = vmatprep.subr.mxu0 %v174
    %229 = vmatpush1.msra.mxu0 %v173
    %230 = vmatprep.subr.mxu0 %v177
    %231 = vmatpush1.msra.mxu0 %v176
    %232 = vmatprep.subr.mxu0 %v180
    %233 = vmatpush1.msra.mxu0 %v179
    %234 = vmatprep.subr.mxu0 %v183
    %235 = vmatpush1.msra.mxu0 %v182
    %236 = vmatprep.subr.mxu0 %v186
    %237 = vmatpush1.msra.mxu0 %v185
    %238 = vmatprep.subr.mxu0 %v189
    %239 = vmatpush1.msra.mxu0 %v188
    %240 = vmatprep.subr.mxu0 0.0
    %241 = vmatpush1.msra.mxu0 0.0
    %242 = vmatprep.subr.mxu0 0.0
    %243 = vmatpush1.msra.mxu0 0.0
    %244 = vmatprep.subr.mxu0 0.0
    %245 = vmatpush1.msra.mxu0 0.0
    %246 = vmatprep.subr.mxu0 0.0
    %247 = vmatpush1.msra.mxu0 0.0
    %248 = vmatprep.subr.mxu0 0.0
    %249 = vmatpush1.msra.mxu0 0.0
    %250 = vmatprep.subr.mxu0 0.0
    %251 = vmatpush1.msra.mxu0 0.0
    %252 = vmatprep.subr.mxu0 0.0
    %253 = vmatpush1.msra.mxu0 0.0
    %254 = vmatprep.subr.mxu0 0.0
    %255 = vmatpush1.msra.mxu0 0.0
    %256 = vmatprep.subr.mxu0 0.0
    %257 = vmatpush1.msra.mxu0 0.0
    %258 = vmatprep.subr.mxu0 0.0
    %259 = vmatpush1.msra.mxu0 0.0
    %260 = vmatprep.subr.mxu0 0.0
    %261 = vmatpush1.msra.mxu0 0.0
    %262 = vmatprep.subr.mxu0 0.0
    %263 = vmatpush1.msra.mxu0 0.0
    %264 = vmatprep.subr.mxu0 0.0
    %265 = vmatpush1.msra.mxu0 0.0
    %266 = vmatprep.subr.mxu0 0.0
    %267 = vmatpush1.msra.mxu0 0.0
    %268 = vmatprep.subr.mxu0 0.0
    %269 = vmatpush1.msra.mxu0 0.0
    %270 = vmatprep.subr.mxu0 0.0
    %271 = vmatpush1.msra.mxu0 0.0
    %272 = vmatprep.mubr.f32.mxu0 0.0
    %273 = vmatmul.mubr.f32.gmra.mrb[0].mxu0 %v142
    %v274 = vpop.f32.mrb[0].mxu0
    %v275 = vadd.f32 %v196, %v274
    %v276 = vpop.f32.mrb[0].mxu0
    %v277 = vadd.f32 %v200, %v276
    %278 = vdwg.mxu0
    %279 = vmatprep.subr.mxu0 0.0
    %280 = vmatpush1.msra.mxu0 %v145
    %281 = vmatprep.subr.mxu0 0.0
    %282 = vmatpush1.msra.mxu0 %v148
    %283 = vmatprep.subr.mxu0 0.0
    %284 = vmatpush1.msra.mxu0 %v151
    %285 = vmatprep.subr.mxu0 0.0
    %286 = vmatpush1.msra.mxu0 %v154
    %287 = vmatprep.subr.mxu0 0.0
    %288 = vmatpush1.msra.mxu0 %v157
    %289 = vmatprep.subr.mxu0 0.0
    %290 = vmatpush1.msra.mxu0 %v160
    %291 = vmatprep.subr.mxu0 0.0
    %292 = vmatpush1.msra.mxu0 %v163
    %293 = vmatprep.subr.mxu0 0.0
    %294 = vmatpush1.msra.mxu0 %v166
    %295 = vmatprep.subr.mxu0 0.0
    %296 = vmatpush1.msra.mxu0 %v169
    %297 = vmatprep.subr.mxu0 0.0
    %298 = vmatpush1.msra.mxu0 %v172
    %299 = vmatprep.subr.mxu0 0.0
    %300 = vmatpush1.msra.mxu0 %v175
    %301 = vmatprep.subr.mxu0 0.0
    %302 = vmatpush1.msra.mxu0 %v178
    %303 = vmatprep.subr.mxu0 0.0
    %304 = vmatpush1.msra.mxu0 %v181
    %305 = vmatprep.subr.mxu0 0.0
    %306 = vmatpush1.msra.mxu0 %v184
    %307 = vmatprep.subr.mxu0 0.0
    %308 = vmatpush1.msra.mxu0 %v187
    %309 = vmatprep.subr.mxu0 0.0
    %310 = vmatpush1.msra.mxu0 %v190
    %311 = vmatprep.subr.mxu0 0.0
    %312 = vmatpush1.msra.mxu0 0.0
    %313 = vmatprep.subr.mxu0 0.0
    %314 = vmatpush1.msra.mxu0 0.0
    %315 = vmatprep.subr.mxu0 0.0
    %316 = vmatpush1.msra.mxu0 0.0
    %317 = vmatprep.subr.mxu0 0.0
    %318 = vmatpush1.msra.mxu0 0.0
    %319 = vmatprep.subr.mxu0 0.0
    %320 = vmatpush1.msra.mxu0 0.0
    %321 = vmatprep.subr.mxu0 0.0
    %322 = vmatpush1.msra.mxu0 0.0
    %323 = vmatprep.subr.mxu0 0.0
    %324 = vmatpush1.msra.mxu0 0.0
    %325 = vmatprep.subr.mxu0 0.0
    %326 = vmatpush1.msra.mxu0 0.0
    %327 = vmatprep.subr.mxu0 0.0
    %328 = vmatpush1.msra.mxu0 0.0
    %329 = vmatprep.subr.mxu0 0.0
    %330 = vmatpush1.msra.mxu0 0.0
    %331 = vmatprep.subr.mxu0 0.0
    %332 = vmatpush1.msra.mxu0 0.0
    %333 = vmatprep.subr.mxu0 0.0
    %334 = vmatpush1.msra.mxu0 0.0
    %335 = vmatprep.subr.mxu0 0.0
    %336 = vmatpush1.msra.mxu0 0.0
    %337 = vmatprep.subr.mxu0 0.0
    %338 = vmatpush1.msra.mxu0 0.0
    %339 = vmatprep.subr.mxu0 0.0
    %340 = vmatpush1.msra.mxu0 0.0
    %341 = vmatprep.subr.mxu0 0.0
    %342 = vmatpush1.msra.mxu0 0.0
    %343 = vmatprep.mubr.f32.mxu0 0.0
    %344 = vmatmul.mubr.f32.gmra.mrb[0].mxu0 %v142
    %v345 = vpop.f32.mrb[0].mxu0
    %v346 = vadd.f32 %v204, %v345
    %v347 = vpop.f32.mrb[0].mxu0
    %348 = vdwg.mxu0
    %349 = vst [vmem:[%s5] sm:$0xff] %v275
    %350 = vst [vmem:[%s5 + $0x8] sm:$0xff] %v277
    %351 = vst [vmem:[%s5 + $0x10] sm:$0xff] %v346
    // Predicated region
    $region30: #{forward.1} parent=1 // pred_check
      _
    $region31: #{forward.1} parent=1 // pred_check_branch
      %353 = sbr.rel (0) target = $region33
    $region32: #{forward.1} parent=1 // pred_region
      _
    $region33: #{forward.1} parent=1 // pred_fallthru
      _
    // Predicated region
    $region34: #{forward.1} parent=1 // pred_check
      _
    $region35: #{forward.1} parent=1 // pred_check_branch
      %355 = sbr.rel (0) target = $region37
    $region36: #{forward.1} parent=1 // pred_region
      _
    $region37: #{forward.1} parent=1 // pred_fallthru
      _
    %356 = vsyncpa [#allocation3], 1
    %357 = vsyncpa [#allocation5], 1

</llo_original>
